<compile_context>
chip_gen: v5e
topology: v5e:2x2
jax: 0.10.0
libtpu: 0.0.40
codegen_flags: <defaults>
</compile_context>

<pallas_src>
import math
from functools import partial

import numpy as np
import jax
import jax.numpy as jnp
from jax.experimental import pallas as pl
from jax.experimental.pallas import tpu as pltpu


# ---------------------------------------------------------------------------
# Pallas kernel: lane-dense broadcast FMA   out = mu + sigma * z
#   z_ref/out_ref: (tile_rows, L)    mu_ref/sigma_ref: (1, L), broadcast on sublanes
# ---------------------------------------------------------------------------
def _cond_fma_kernel(z_ref, mu_ref, sigma_ref, out_ref):
    z = z_ref[...].astype(jnp.float32)                      # bf16 -> f32 upcast
    out_ref[...] = (mu_ref[...] + sigma_ref[...] * z).astype(out_ref.dtype)


def _lane_width(object_dim: int) -> int:
    """Smallest lane width that is a multiple of both D and 128 (lane-dense)."""
    return object_dim * (128 // math.gcd(object_dim, 128))


def _tile_rows_cap(lane_width: int, target_bytes: int = 4 * 1024 * 1024) -> int:
    """Rows per block so one f32 output block is ~4 MiB; multiple of 16 (bf16)."""
    cap = (target_bytes // (4 * lane_width)) // 16 * 16
    return max(16, cap)


def _choose_tiling(n_rows: int, lane_width: int):
    """Pick (tile_rows, n_blocks).  Tiny -> one full-array block; medium -> split
    into >=2 blocks (v7x megacore); large -> cap-sized blocks + ragged tail."""
    cap = _tile_rows_cap(lane_width)
    sub = 16  # bf16 sublane packing
    if n_rows <= 4 * sub:
        return n_rows, 1                      # block == full array: no (16,128) constraint
    if n_rows <= cap:
        half = -(-n_rows // 2)
        tile = -(-half // sub) * sub          # ceil(n_rows/2) rounded up to 16
        return tile, pl.cdiv(n_rows, tile)
    return cap, pl.cdiv(n_rows, cap)


def prepare_conditioning_rows(slots_mu, slots_logsigma, object_dim, lane_width):
    """Param-change-time work: sigma = exp(logsigma) once, tiled lane-dense.
    Returns (1, L) f32 mu_row and sigma_row.  Cache alongside z2d."""
    reps = lane_width // object_dim
    mu_row = jnp.tile(slots_mu.reshape(1, object_dim).astype(jnp.float32), (1, reps))
    sigma_row = jnp.tile(
        jnp.exp(slots_logsigma.reshape(1, object_dim).astype(jnp.float32)), (1, reps)
    )
    return mu_row, sigma_row


@partial(jax.jit, static_argnames=("batch_size", "n_slots", "object_dim", "out_dtype"))
def qmc_conditioning(mu_row, sigma_row, z2d, batch_size, n_slots, object_dim,
                     out_dtype=jnp.float32):
    """out[b,s,:] = mu + exp(logsigma) * z[b,s,:]  on a lane-dense (R, L) slab.

    mu_row/sigma_row: (1, L) f32 from `prepare_conditioning_rows`.
    z2d:              (R, L) bf16 slab from `prepare_qmc_normal_samples`.
    Returns (batch_size, n_slots, object_dim) in out_dtype.
    """
    n_rows, lane_w = z2d.shape
    tile_rows, n_blocks = _choose_tiling(n_rows, lane_w)

    z_bytes = n_rows * lane_w * z2d.dtype.itemsize
    out_bytes = n_rows * lane_w * jnp.dtype(out_dtype).itemsize
    cost = pl.CostEstimate(
        flops=2 * n_rows * lane_w,
        transcendentals=0,
        bytes_accessed=z_bytes + out_bytes + 2 * 4 * lane_w,
    )

    out2d = pl.pallas_call(
        _cond_fma_kernel,
        out_shape=jax.ShapeDtypeStruct((n_rows, lane_w), out_dtype),
        grid=(n_blocks,),
        in_specs=[
            pl.BlockSpec((tile_rows, lane_w), lambda i: (i, 0)),
            pl.BlockSpec((1, lane_w), lambda i: (0, 0)),
            pl.BlockSpec((1, lane_w), lambda i: (0, 0)),
        ],
        out_specs=pl.BlockSpec((tile_rows, lane_w), lambda i: (i, 0)),
        compiler_params=pltpu.CompilerParams(
            dimension_semantics=("parallel",),
            vmem_limit_bytes=32 * 1024 * 1024,
        ),
        cost_estimate=cost,
    )(z2d, mu_row, sigma_row)

    total = batch_size * n_slots * object_dim
    if total == n_rows * lane_w:
        # No padding: pure metadata reshape, no copy.
        return out2d.reshape(batch_size, n_slots, object_dim)
    # Padded tail exists only in the last row; slice it off.
    return out2d.reshape(-1)[:total].reshape(batch_size, n_slots, object_dim)


# ---------------------------------------------------------------------------
# Host-side glue: deterministic Halton QMC uniforms -> float64 inverse normal CDF
# ---------------------------------------------------------------------------
def _first_primes(n):
    primes, cand = [], 2
    while len(primes) < n:
        if all(cand % p for p in primes):
            primes.append(cand)
        cand += 1
    return primes


def _radical_inverse(indices, base):
    result = np.zeros_like(indices, dtype=np.float64)
    f = 1.0 / base
    i = indices.copy()
    while np.any(i > 0):
        result += f * (i % base)
        i //= base
        f /= base
    return result


def halton_uniform(n_points, dims, start=0):
    """Deterministic low-discrepancy uniform points in (0,1)^dims."""
    primes = _first_primes(dims)
    idx = np.arange(start + 1, start + n_points + 1, dtype=np.int64)  # skip 0
    u = np.stack([_radical_inverse(idx, p) for p in primes], axis=-1)
    eps = 1e-6
    return np.clip(u, eps, 1.0 - eps)


def _ndtri_np(p):
    """Acklam inverse normal CDF, evaluated in float64 on host (rel. err ~1e-9)."""
    p = np.asarray(p, dtype=np.float64)
    a = (-3.969683028665376e01, 2.209460984245205e02, -2.759285104469687e02,
         1.383577518672690e02, -3.066479806614716e01, 2.506628277459239e00)
    b = (-5.447609879822406e01, 1.615858368580409e02, -1.556989798598866e02,
         6.680131188771972e01, -1.328068155288572e01)
    c = (-7.784894002430293e-03, -3.223964580411365e-01, -2.400758277161838e00,
         -2.549732539343734e00, 4.374664141464968e00, 2.938163982698783e00)
    d = (7.784695709041462e-03, 3.224671290700398e-01, 2.445134137142996e00,
         3.754408661907416e00)
    p_low, p_high = 0.02425, 1.0 - 0.02425

    x = np.empty_like(p)

    m = (p >= p_low) & (p <= p_high)
    q = p[m] - 0.5
    r = q * q
    x[m] = (((((a[0] * r + a[1]) * r + a[2]) * r + a[3]) * r + a[4]) * r + a[5]) * q / (
        ((((b[0] * r + b[1]) * r + b[2]) * r + b[3]) * r + b[4]) * r + 1.0)

    m = p < p_low
    q = np.sqrt(-2.0 * np.log(p[m]))
    x[m] = (((((c[0] * q + c[1]) * q + c[2]) * q + c[3]) * q + c[4]) * q + c[5]) / (
        (((d[0] * q + d[1]) * q + d[2]) * q + d[3]) * q + 1.0)

    m = p > p_high
    q = np.sqrt(-2.0 * np.log(1.0 - p[m]))
    x[m] = -(((((c[0] * q + c[1]) * q + c[2]) * q + c[3]) * q + c[4]) * q + c[5]) / (
        (((d[0] * q + d[1]) * q + d[2]) * q + d[3]) * q + 1.0)

    return x


def prepare_qmc_normal_samples(batch_size, n_slots, object_dim,
                               dtype=jnp.bfloat16, sequence_start=0):
    """QMC standard-normal samples, flattened lane-dense into an (R, L) slab.

    R = ceil(B*S*D / L), L = lcm(D, 128); the (at most L-1 element) tail of the
    last row is zero-padded.  Pass a new `sequence_start` per forward to advance
    the quasi-random sequence like the torch module's scipy sampler does.
    """
    n_elements = batch_size * n_slots
    n_rounded2 = 2 ** int(np.ceil(np.log2(max(n_elements, 1))))
    u = halton_uniform(n_rounded2, object_dim, start=sequence_start)[:n_elements]
    z = _ndtri_np(u)                                              # (B*S, D) f64

    lane_w = _lane_width(object_dim)
    total = n_elements * object_dim
    n_rows = -(-total // lane_w)

    flat = np.zeros(n_rows * lane_w, dtype=np.float32)
    flat[:total] = z.reshape(-1).astype(np.float32)
    return jnp.asarray(flat.reshape(n_rows, lane_w), dtype=dtype)


def xavier_uniform_init(key, shape):
    """torch.nn.init.xavier_uniform_ for a (1, 1, D) tensor: fan_in = fan_out = D."""
    d = shape[-1]
    bound = np.sqrt(6.0 / (d + d))
    return jax.random.uniform(key, shape, jnp.float32, minval=-bound, maxval=bound)


if __name__ == "__main__":
    batch_size, n_slots, object_dim = 2, 8, 32

    key = jax.random.PRNGKey(0)
    k_mu, k_sig = jax.random.split(key)
    slots_mu = xavier_uniform_init(k_mu, (1, 1, object_dim))
    slots_logsigma = xavier_uniform_init(k_sig, (1, 1, object_dim))

    lane_w = _lane_width(object_dim)

    # Init-time / param-change-time work, hoisted out of the hot forward path.
    z2d = prepare_qmc_normal_samples(batch_size, n_slots, object_dim)         # bf16 slab
    mu_row, sigma_row = prepare_conditioning_rows(slots_mu, slots_logsigma,
                                                  object_dim, lane_w)

    out = qmc_conditioning(mu_row, sigma_row, z2d,
                           batch_size, n_slots, object_dim)
    out = jax.block_until_ready(out)

    # Reference forward with the exact same (bf16-quantized) z and the same
    # device-computed mu/sigma rows, in f32.
    total = batch_size * n_slots * object_dim
    z_ref = (np.asarray(z2d.astype(jnp.float32)).reshape(-1)[:total]
             .reshape(batch_size, n_slots, object_dim))
    mu_np = np.asarray(mu_row)[0, :object_dim].reshape(1, 1, object_dim)
    sigma_np = np.asarray(sigma_row)[0, :object_dim].reshape(1, 1, object_dim)
    ref = mu_np + sigma_np * z_ref

    assert out.shape == (batch_size, n_slots, object_dim)
    assert out.dtype == jnp.float32
    np.testing.assert_allclose(np.array(out), ref, rtol=1e-5, atol=1e-6)

    print("KERNEL_OK")
</pallas_src>

<mosaic_0001>
module attributes {stable_mosaic.version = 11 : i64} {
  func.func @_cond_fma_kernel(%arg0: i32, %arg1: memref<4x128xbf16, #tpu.memory_space<vmem>>, %arg2: memref<1x128xf32, #tpu.memory_space<vmem>>, %arg3: memref<1x128xf32, #tpu.memory_space<vmem>>, %arg4: memref<4x128xf32, #tpu.memory_space<vmem>>) attributes {dimension_semantics = [#tpu.dimension_semantics<parallel>], iteration_bounds = array<i64: 1>, scalar_prefetch = 0 : i64, scratch_operands = 0 : i64, tpu.core_type = #tpu.core_type<tc>, window_params = [{transform_indices = @transform_0, window_bounds = array<i64: 4, 128>}, {pipeline_mode = #tpu.pipeline_mode<synchronous>, transform_indices = @transform_1, window_bounds = array<i64: 1, 128>}, {pipeline_mode = #tpu.pipeline_mode<synchronous>, transform_indices = @transform_2, window_bounds = array<i64: 1, 128>}, {transform_indices = @transform_3, window_bounds = array<i64: 4, 128>}]} {
    %c0 = arith.constant 0 : index
    %c0_0 = arith.constant 0 : index
    %0 = vector.load %arg1[%c0, %c0_0] : memref<4x128xbf16, #tpu.memory_space<vmem>>, vector<4x128xbf16>
    %1 = arith.extf %0 : vector<4x128xbf16> to vector<4x128xf32>
    %c0_1 = arith.constant 0 : index
    %c0_2 = arith.constant 0 : index
    %2 = vector.load %arg2[%c0_1, %c0_2] : memref<1x128xf32, #tpu.memory_space<vmem>>, vector<1x128xf32>
    %c0_3 = arith.constant 0 : index
    %c0_4 = arith.constant 0 : index
    %3 = vector.load %arg3[%c0_3, %c0_4] : memref<1x128xf32, #tpu.memory_space<vmem>>, vector<1x128xf32>
    %4 = vector.broadcast %3 : vector<1x128xf32> to vector<4x128xf32>
    %5 = arith.mulf %4, %1 : vector<4x128xf32>
    %6 = vector.broadcast %2 : vector<1x128xf32> to vector<4x128xf32>
    %7 = arith.addf %6, %5 : vector<4x128xf32>
    %c0_5 = arith.constant 0 : index
    %c0_6 = arith.constant 0 : index
    %8 = vector.load %arg4[%c0_5, %c0_6] : memref<4x128xf32, #tpu.memory_space<vmem>>, vector<4x128xf32>
    tpu.vector_store %arg4[%c0_5, %c0_6], %7 {strides = array<i32>} : memref<4x128xf32, #tpu.memory_space<vmem>>, vector<4x128xf32>,
    return
  }
  func.func @transform_0(%arg0: i32) -> (i32, i32) {
    %c0_i32 = arith.constant 0 : i32
    %c0_i32_0 = arith.constant 0 : i32
    return %arg0, %c0_i32 : i32, i32
  }
  func.func @transform_1(%arg0: i32) -> (i32, i32) {
    %c0_i32 = arith.constant 0 : i32
    %c0_i32_0 = arith.constant 0 : i32
    %c0_i32_1 = arith.constant 0 : i32
    return %c0_i32, %c0_i32_0 : i32, i32
  }
  func.func @transform_2(%arg0: i32) -> (i32, i32) {
    %c0_i32 = arith.constant 0 : i32
    %c0_i32_0 = arith.constant 0 : i32
    %c0_i32_1 = arith.constant 0 : i32
    return %c0_i32, %c0_i32_0 : i32, i32
  }
  func.func @transform_3(%arg0: i32) -> (i32, i32) {
    %c0_i32 = arith.constant 0 : i32
    %c0_i32_0 = arith.constant 0 : i32
    return %arg0, %c0_i32 : i32, i32
  }
}

</mosaic_0001>

<llo_original>
// kernel: qmc_conditioning.1
$region0: #{qmc_conditioning.1}
  #allocation0 [shape = 'u32[]', space=smem, size = 0x4, offset = 0x4, fixed_abs, tag = 'smem constant byte address 0x4 - core index']
  #allocation1 [shape = 'u32[72,128]{1,0:T(1,128)}', space=vmem, size = 0x9000, scoped, tag = 'internal scratch']
  %s0 = inlined_call_operand.hbm [shape: bf16[4,128], index: 0, kind: input, shape index: {}]
  %s1 = inlined_call_operand.hbm [shape: f32[1,128], index: 1, kind: input, shape index: {}]
  %s2 = inlined_call_operand.hbm [shape: f32[1,128], index: 2, kind: input, shape index: {}]
  %s3 = inlined_call_operand.vmem [shape: f32[4,128], index: 3, kind: output, shape index: {}]
  %s4 = sld [smem:[#allocation0]]
  $region34: #{qmc_conditioning.1} parent=0
    _
  %s6 = ssub.s32 1, %s4
  %s7 = scalar_select 0, %s6, %s4
  $region1: #{qmc_conditioning.1} parent=0
    #allocation2 [shape = 'u8[1024]{0}', space=vmem, size = 0x400, scoped, tag = 'input window, operand 0, single buffered']
    #allocation3 [shape = 's32[1]{0}', space=sflag, size = 0x4, scoped, tag = 'scoped memory for qmc_conditioning.1']
    #allocation4 [shape = 'u8[512]{0}', space=vmem, size = 0x400, scoped, tag = 'input window, operand 1, single buffered']
    #allocation5 [shape = 's32[1]{0}', space=sflag, size = 0x4, scoped, tag = 'scoped memory for qmc_conditioning.1']
    #allocation6 [shape = 'u8[512]{0}', space=vmem, size = 0x400, scoped, tag = 'input window, operand 2, single buffered']
    %8 = vsyncpa [#allocation3], 0
    %9 = vsyncpa [#allocation5], 0
    // Predicated region
    $region2: #{qmc_conditioning.1} parent=1 // pred_check
      _
    $region3: #{qmc_conditioning.1} parent=1 // pred_check_branch
      %11 = sbr.rel (0) target = $region5
    $region4: #{qmc_conditioning.1} parent=1 // pred_region
      %13 = vsyncadd [#allocation3], 0
      %s15 = sshll.u32 %s0, 4
      %s16 = int_to_ptr.hbm [resolvable:$true] %s15
      %s17 = sshll.u32 [#allocation2], 4
      %s18 = int_to_ptr.vmem [resolvable:$true] %s17
      %20 = dma.hbm_to_vmem [thread:$0]  %s16, 32, %s18, [#allocation3]
    $region5: #{qmc_conditioning.1} parent=1 // pred_fallthru
      _
    // Predicated region
    $region6: #{qmc_conditioning.1} parent=1 // pred_check
      _
    $region7: #{qmc_conditioning.1} parent=1 // pred_check_branch
      %22 = sbr.rel (0) target = $region9
    $region8: #{qmc_conditioning.1} parent=1 // pred_region
      %24 = vsyncadd [#allocation5], 0
      %s26 = sshll.u32 %s1, 4
      %s27 = int_to_ptr.hbm [resolvable:$true] %s26
      %s28 = sshll.u32 [#allocation4], 4
      %s29 = int_to_ptr.vmem [resolvable:$true] %s28
      %31 = dma.hbm_to_vmem [thread:$0]  %s27, 16, %s29, [#allocation5]
    $region9: #{qmc_conditioning.1} parent=1 // pred_fallthru
      _
    // Predicated region
    $region10: #{qmc_conditioning.1} parent=1 // pred_check
      _
    $region11: #{qmc_conditioning.1} parent=1 // pred_check_branch
      %33 = sbr.rel (0) target = $region13
    $region12: #{qmc_conditioning.1} parent=1 // pred_region
      %35 = vsyncadd [#allocation5], 0
      %s37 = sshll.u32 %s2, 4
      %s38 = int_to_ptr.hbm [resolvable:$true] %s37
      %s39 = sshll.u32 [#allocation6], 4
      %s40 = int_to_ptr.vmem [resolvable:$true] %s39
      %42 = dma.hbm_to_vmem [thread:$0]  %s38, 16, %s40, [#allocation5]
    $region13: #{qmc_conditioning.1} parent=1 // pred_fallthru
      _
    // Predicated region
    $region14: #{qmc_conditioning.1} parent=1 // pred_check
      _
    $region15: #{qmc_conditioning.1} parent=1 // pred_check_branch
      %44 = sbr.rel (0) target = $region17
    $region16: #{qmc_conditioning.1} parent=1 // pred_region
      %46 = dma.done [#allocation3], 32
    $region17: #{qmc_conditioning.1} parent=1 // pred_fallthru
      _
    // Predicated region
    $region18: #{qmc_conditioning.1} parent=1 // pred_check
      _
    $region19: #{qmc_conditioning.1} parent=1 // pred_check_branch
      %48 = sbr.rel (0) target = $region21
    $region20: #{qmc_conditioning.1} parent=1 // pred_region
      %50 = dma.done [#allocation5], 16
    $region21: #{qmc_conditioning.1} parent=1 // pred_fallthru
      _
    // Predicated region
    $region22: #{qmc_conditioning.1} parent=1 // pred_check
      _
    $region23: #{qmc_conditioning.1} parent=1 // pred_check_branch
      %52 = sbr.rel (0) target = $region25
    $region24: #{qmc_conditioning.1} parent=1 // pred_region
      %54 = dma.done [#allocation5], 16
    $region25: #{qmc_conditioning.1} parent=1 // pred_fallthru
      _
    %v55 = vld [vmem:[#allocation2] sm:$0x3]
    %v56 = vunpack.c.l.bf16 %v55
    %v57 = vld [vmem:[#allocation4] sm:$0x1]
    %v58 = vld [vmem:[#allocation6] sm:$0x1]
    %v60 = vperm.slane %v58, 0
    %v62 = vmul.f32 %v60, %v56
    %v64 = vperm.slane %v57, 0
    %v66 = vadd.f32 %v64, %v62
    %67 = vst [vmem:[%s3] sm:$0xf] %v66
    // Predicated region
    $region26: #{qmc_conditioning.1} parent=1 // pred_check
      _
    $region27: #{qmc_conditioning.1} parent=1 // pred_check_branch
      %69 = sbr.rel (0) target = $region29
    $region28: #{qmc_conditioning.1} parent=1 // pred_region
      _
    $region29: #{qmc_conditioning.1} parent=1 // pred_fallthru
      _
    // Predicated region
    $region30: #{qmc_conditioning.1} parent=1 // pred_check
      _
    $region31: #{qmc_conditioning.1} parent=1 // pred_check_branch
      %71 = sbr.rel (0) target = $region33
    $region32: #{qmc_conditioning.1} parent=1 // pred_region
      _
    $region33: #{qmc_conditioning.1} parent=1 // pred_fallthru
      _
    %72 = vsyncpa [#allocation3], 1
    %73 = vsyncpa [#allocation5], 1

</llo_original>
